<compile_context>
chip_gen: v7x
topology: tpu7x:2x2x1
jax: 0.10.0
libtpu: 0.0.40
codegen_flags: <defaults>
</compile_context>

<pallas_src>
from functools import partial
import math

import jax
import jax.numpy as jnp
from jax.experimental import pallas as pl
from jax.experimental.pallas import tpu as pltpu


# ---------------------------------------------------------------------------
# torch.split size semantics
# ---------------------------------------------------------------------------
def _normalize_sizes(size_or_sizes, dim_len):
    """int -> equal chunks (last may be smaller); list -> must sum to dim_len."""
    if isinstance(size_or_sizes, int):
        s = size_or_sizes
        assert s > 0, "split size must be positive"
        return tuple(min(s, dim_len - i) for i in range(0, dim_len, s))
    sizes = tuple(int(s) for s in size_or_sizes)
    assert sum(sizes) == dim_len, "sizes must sum to the length of `dim`"
    return sizes


# ---------------------------------------------------------------------------
# Kernel: fan out one HBM->HBM DMA per chunk
# ---------------------------------------------------------------------------
def _split_dma_kernel(x_ref, *rest, col_offsets, col_widths):
    """x_ref: full (pre, C) input left in HBM (memory_space=pl.ANY).

    rest = (out_ref_0, ..., out_ref_{n-1}, dma_sem) where out_ref_i is the
    HBM destination for chunk i and dma_sem is a DMA semaphore array of
    shape (n,).  Offsets/widths are static Python ints (closed over), so the
    whole body lowers to n strided-copy descriptors: start them all so they
    overlap across DMA engines, then wait for completion.
    """
    n = len(col_widths)
    out_refs = rest[:n]
    sem = rest[n]

    copies = []
    for i, (off, width) in enumerate(zip(col_offsets, col_widths)):
        cp = pltpu.make_async_copy(
            x_ref.at[:, pl.ds(off, width)],  # column window of chunk i
            out_refs[i],
            sem.at[i],
        )
        cp.start()
        copies.append(cp)
    for cp in copies:
        cp.wait()


# ---------------------------------------------------------------------------
# Wrapper: Pallas equivalent of SplitTensor.forward
# ---------------------------------------------------------------------------
def split_tensor(x, size_or_sizes, dim):
    """Returns a tuple of chunks, same semantics as torch.split(x, sizes, dim)."""
    ndim = x.ndim
    dim = dim % ndim
    dim_len = x.shape[dim]
    sizes = _normalize_sizes(size_or_sizes, dim_len)

    pre = math.prod(x.shape[:dim])           # prod(()) == 1
    post = math.prod(x.shape[dim + 1:])
    C = dim_len * post

    chunk_shapes = tuple(x.shape[:dim] + (sz,) + x.shape[dim + 1:] for sz in sizes)

    # Degenerate cases: nothing to copy.
    if len(sizes) == 1:
        return (x,)
    if pre == 0 or post == 0 or dim_len == 0:
        return tuple(jnp.zeros(s, x.dtype) for s in chunk_shapes)

    # Element offsets of each chunk along `dim`.
    offsets = []
    acc = 0
    for sz in sizes:
        offsets.append(acc)
        acc += sz

    # Zero-width chunks cannot be DMA'd; fill them with empty arrays and only
    # route non-empty chunks through the kernel.
    nz = [(i, offsets[i], sizes[i]) for i in range(len(sizes)) if sizes[i] > 0]

    # Lane-dense 2D presentation (free metadata reshape of a contiguous array):
    # chunk i is the contiguous column window [off*post, off*post + sz*post).
    x2 = x.reshape(pre, C)
    col_offsets = tuple(o * post for (_i, o, _s) in nz)
    col_widths = tuple(s * post for (_i, _o, s) in nz)

    out_shapes = tuple(
        jax.ShapeDtypeStruct((pre, w), x.dtype) for w in col_widths
    )

    outs2 = pl.pallas_call(
        partial(_split_dma_kernel, col_offsets=col_offsets, col_widths=col_widths),
        # Input and outputs all stay in HBM; the kernel body only issues DMAs.
        in_specs=[pl.BlockSpec(memory_space=pl.ANY)],
        out_specs=tuple(pl.BlockSpec(memory_space=pl.ANY) for _ in nz),
        out_shape=out_shapes,
        scratch_shapes=[pltpu.SemaphoreType.DMA((len(nz),))],
    )(x2)

    if not isinstance(outs2, (list, tuple)):
        outs2 = (outs2,)

    results = [None] * len(sizes)
    for (idx, _o, _s), y2 in zip(nz, outs2):
        results[idx] = y2.reshape(chunk_shapes[idx])
    for idx, sz in enumerate(sizes):
        if sz == 0:
            results[idx] = jnp.zeros(chunk_shapes[idx], x.dtype)
    return tuple(results)


# ---------------------------------------------------------------------------
# Demo / sanity check
# ---------------------------------------------------------------------------
if __name__ == "__main__":
    key = jax.random.PRNGKey(0)
    # SplitTensor(size_or_sizes=[1, 3], dim=1) applied to an NCHW feature map.
    x = jax.random.normal(key, (2, 4, 16, 16), dtype=jnp.float32)

    # List sizes along the channel dim.
    outs = jax.block_until_ready(split_tensor(x, [1, 3], dim=1))
    refs = (x[:, 0:1], x[:, 1:4])
    for o, r in zip(outs, refs):
        assert o.shape == r.shape and o.dtype == r.dtype
        assert bool(jnp.all(o == r))

    # Int split size (torch.split int semantics).
    outs2 = jax.block_until_ready(split_tensor(x, 2, dim=1))
    refs2 = (x[:, 0:2], x[:, 2:4])
    for o, r in zip(outs2, refs2):
        assert o.shape == r.shape and bool(jnp.all(o == r))

    # Split along the last axis: element offsets that are not 128-lane
    # alignable are handled by the DMA engine directly (no fallback path).
    outs3 = jax.block_until_ready(split_tensor(x, [4, 12], dim=3))
    refs3 = (x[..., 0:4], x[..., 4:16])
    for o, r in zip(outs3, refs3):
        assert o.shape == r.shape and bool(jnp.all(o == r))

    # Sub-32-bit dtype: DMA copies are dtype-agnostic, no special tiling needed.
    xb = x.astype(jnp.bfloat16)
    outs4 = jax.block_until_ready(split_tensor(xb, [1, 3], dim=1))
    refs4 = (xb[:, 0:1], xb[:, 1:4])
    for o, r in zip(outs4, refs4):
        assert o.shape == r.shape and o.dtype == r.dtype
        assert bool(jnp.all(o == r))

    print("KERNEL_OK")
</pallas_src>

<mosaic_0001>
module attributes {stable_mosaic.version = 11 : i64} {
  func.func @_split_dma_kernel(%arg0: memref<2x1024xf32, #tpu.memory_space<any>>, %arg1: memref<2x256xf32, #tpu.memory_space<any>>, %arg2: memref<2x768xf32, #tpu.memory_space<any>>, %arg3: memref<2x!tpu.dma_semaphore, #tpu.memory_space<semaphore_mem>>) attributes {dimension_semantics = [], scalar_prefetch = 0 : i64, scratch_operands = 1 : i64, tpu.core_type = #tpu.core_type<tc>} {
    %c0_i32 = arith.constant 0 : i32
    %c0_i32_0 = arith.constant 0 : i32
    %c0_i32_1 = arith.constant 0 : i32
    %0 = tpu.memref_slice %arg0[%c0_i32_0, %c0_i32_1] : memref<2x1024xf32, #tpu.memory_space<any>> -> memref<2x256xf32, #tpu.memory_space<any>>
    %1 = tpu.memref_slice %arg3[%c0_i32] : memref<2x!tpu.dma_semaphore, #tpu.memory_space<semaphore_mem>> -> memref<1x!tpu.dma_semaphore, #tpu.memory_space<semaphore_mem>>
    %2 = tpu.memref_squeeze %1 : memref<1x!tpu.dma_semaphore, #tpu.memory_space<semaphore_mem>> -> memref<!tpu.dma_semaphore, #tpu.memory_space<semaphore_mem>>
    tpu.enqueue_dma source(%0 : memref<2x256xf32, #tpu.memory_space<any>>) target(%arg1 : memref<2x256xf32, #tpu.memory_space<any>>) target_semaphore(%2 : memref<!tpu.dma_semaphore, #tpu.memory_space<semaphore_mem>>)
    %c1_i32 = arith.constant 1 : i32
    %c0_i32_2 = arith.constant 0 : i32
    %c256_i32 = arith.constant 256 : i32
    %3 = tpu.memref_slice %arg0[%c0_i32_2, %c256_i32] : memref<2x1024xf32, #tpu.memory_space<any>> -> memref<2x768xf32, #tpu.memory_space<any>>
    %4 = tpu.memref_slice %arg3[%c1_i32] : memref<2x!tpu.dma_semaphore, #tpu.memory_space<semaphore_mem>> -> memref<1x!tpu.dma_semaphore, #tpu.memory_space<semaphore_mem>>
    %5 = tpu.memref_squeeze %4 : memref<1x!tpu.dma_semaphore, #tpu.memory_space<semaphore_mem>> -> memref<!tpu.dma_semaphore, #tpu.memory_space<semaphore_mem>>
    tpu.enqueue_dma source(%3 : memref<2x768xf32, #tpu.memory_space<any>>) target(%arg2 : memref<2x768xf32, #tpu.memory_space<any>>) target_semaphore(%5 : memref<!tpu.dma_semaphore, #tpu.memory_space<semaphore_mem>>)
    %c0_i32_3 = arith.constant 0 : i32
    %c0_i32_4 = arith.constant 0 : i32
    %c0_i32_5 = arith.constant 0 : i32
    %6 = tpu.memref_slice %arg0[%c0_i32_4, %c0_i32_5] : memref<2x1024xf32, #tpu.memory_space<any>> -> memref<2x256xf32, #tpu.memory_space<any>>
    %7 = tpu.memref_slice %arg3[%c0_i32_3] : memref<2x!tpu.dma_semaphore, #tpu.memory_space<semaphore_mem>> -> memref<1x!tpu.dma_semaphore, #tpu.memory_space<semaphore_mem>>
    %8 = tpu.memref_squeeze %7 : memref<1x!tpu.dma_semaphore, #tpu.memory_space<semaphore_mem>> -> memref<!tpu.dma_semaphore, #tpu.memory_space<semaphore_mem>>
    tpu.wait_dma2 semaphore(%8 : memref<!tpu.dma_semaphore, #tpu.memory_space<semaphore_mem>>) src(%6 : memref<2x256xf32, #tpu.memory_space<any>>) dst(%arg1 : memref<2x256xf32, #tpu.memory_space<any>>)
    %c1_i32_6 = arith.constant 1 : i32
    %c0_i32_7 = arith.constant 0 : i32
    %c256_i32_8 = arith.constant 256 : i32
    %9 = tpu.memref_slice %arg0[%c0_i32_7, %c256_i32_8] : memref<2x1024xf32, #tpu.memory_space<any>> -> memref<2x768xf32, #tpu.memory_space<any>>
    %10 = tpu.memref_slice %arg3[%c1_i32_6] : memref<2x!tpu.dma_semaphore, #tpu.memory_space<semaphore_mem>> -> memref<1x!tpu.dma_semaphore, #tpu.memory_space<semaphore_mem>>
    %11 = tpu.memref_squeeze %10 : memref<1x!tpu.dma_semaphore, #tpu.memory_space<semaphore_mem>> -> memref<!tpu.dma_semaphore, #tpu.memory_space<semaphore_mem>>
    tpu.wait_dma2 semaphore(%11 : memref<!tpu.dma_semaphore, #tpu.memory_space<semaphore_mem>>) src(%9 : memref<2x768xf32, #tpu.memory_space<any>>) dst(%arg2 : memref<2x768xf32, #tpu.memory_space<any>>)
    return
  }
}

</mosaic_0001>

<llo_original>
// kernel: tpu_custom_call.1
$region0: #{tpu_custom_call.1}
  #allocation0 [shape = 'u32[]', space=smem, size = 0x4, offset = 0x4, fixed_abs, tag = 'smem constant byte address 0x4 - core index']
  #allocation1 [shape = 'u32[144,128]{1,0:T(1,128)}', space=vmem, size = 0x12000, scoped, tag = 'internal scratch']
  #allocation2 [shape = 's32[2]{0}', space=sflag, size = 0x8, scoped, tag = 'scratch operand']
  #allocation3 [shape = 's32[]', space=sflag, size = 0x4, offset = 0, fixed_abs, tag = 'sflag constant byte address 0x0 - dummy sync flag']
  #allocation4 [shape = 'u32[0]{0}', space=smem, size = 0, offset = 0, fixed_abs, tag = 'smem constant byte address 0x0 - null']
  #allocation5 [shape = 's32[]', space=sflag, size = 0x4, offset = 0, fixed_abs, tag = 'sflag constant byte address 0x0 - dummy sync flag']
  #allocation6 [shape = 'u32[0]{0}', space=smem, size = 0, offset = 0, fixed_abs, tag = 'smem constant byte address 0x0 - null']
  %s0 = inlined_call_operand.hbm [shape: f32[2,1024], index: 0, kind: input, shape index: {}]
  %s1 = inlined_call_operand.hbm [shape: f32[2,256], index: 1, kind: output, shape index: {0}]
  %s2 = inlined_call_operand.hbm [shape: f32[2,768], index: 2, kind: output, shape index: {1}]
  %3 = xla_tuple %s1, %s2
  %s4 = sld [smem:[#allocation0]]
  $region2: #{tpu_custom_call.1} parent=0
    _
  %s6 = ssub.s32 1, %s4
  %s7 = scalar_select 0, %s6, %s4
  %s9 = sshll.u32 1, 14
  %s10 = sxor.u32 4294967295, %s9
  %s13 = sshll.u32 3, 24
  %s14 = sxor.u32 4294967295, %s13
  %s15 = sand.u32 0, %s14
  %s17 = sor.u32 %s15, 0
  %20 = dma.general %s0, 64, %s1, [#allocation2], [#allocation3], [#allocation4], %s17, 0
  %s21 = scalar_lea.hbm %s0, 64
  %s22 = scalar_lea.sflag [#allocation2], 1
  %s24 = sshll.u32 1, 14
  %s25 = sxor.u32 4294967295, %s24
  %s28 = sshll.u32 3, 24
  %s29 = sxor.u32 4294967295, %s28
  %s30 = sand.u32 0, %s29
  %s32 = sor.u32 %s30, 0
  %35 = dma.general %s21, 192, %s2, %s22, [#allocation5], [#allocation6], %s32, 0
  %s36 = smul.u32 2, 1
  %s37 = smul.u32 %s36, 2
  %s38 = sshll.u32 %s37, 4
  %39 = dma.done [#allocation2], %s38
  %s40 = smul.u32 %s36, 6
  %s41 = sshll.u32 %s40, 4
  %42 = dma.done %s22, %s41
  %43 = vsyncmov [#allocation2]
  %s44 = vpop.sfrf %43
  %p45 = scmp.eq.s32.totalorder %s44, 0
  %p46 = pneg %p45
  %48 = shalt.err (%p46)
  %s49 = scalar_lea.sflag [#allocation2], 1
  %50 = vsyncmov %s49
  %s51 = vpop.sfrf %50
  %p52 = scmp.eq.s32.totalorder %s51, 0
  %p53 = pneg %p52
  %55 = shalt.err (%p53)

</llo_original>
